<compile_context>
chip_gen: v7x
topology: tpu7x:2x2x1
jax: 0.10.0
libtpu: 0.0.40
codegen_flags: <defaults>
</compile_context>

<pallas_src>
import functools

import jax
import jax.numpy as jnp
from jax import lax
from jax.experimental import pallas as pl
from jax.experimental.pallas import tpu as pltpu

_COS_EPS = 1e-8


# ---------------------------------------------------------------------------
# Kernels: each grid block emits a (1, TILE_HW) per-pixel partial-loss row.
# ---------------------------------------------------------------------------
def _mse_kernel(f_ref, fo_ref, out_ref):
    f = f_ref[0].astype(jnp.float32)       # (C, T)
    fo = fo_ref[0].astype(jnp.float32)     # (C, T)
    d = f - fo
    out_ref[0] = jnp.sum(d * d, axis=0, keepdims=True)          # (1, T)


def _mse_kernel_masked(f_ref, fo_ref, m_ref, out_ref):
    f = f_ref[0].astype(jnp.float32)       # (C, T)
    fo = fo_ref[0].astype(jnp.float32)     # (C, T)
    d = f - fo
    sq_sum = jnp.sum(d * d, axis=0, keepdims=True)               # (1, T)
    out_ref[0] = sq_sum * m_ref[0].astype(jnp.float32)           # (1, T)


def _cos_loss_row(f_ref, fo_ref):
    f = f_ref[0].astype(jnp.float32)       # (C, T)
    fo = fo_ref[0].astype(jnp.float32)     # (C, T)
    dot = jnp.sum(f * fo, axis=0, keepdims=True)                 # (1, T)
    nf2 = jnp.sum(f * f, axis=0, keepdims=True)
    nfo2 = jnp.sum(fo * fo, axis=0, keepdims=True)
    eps2 = jnp.float32(_COS_EPS * _COS_EPS)
    # 1/max(|x|,eps) == rsqrt(max(|x|^2, eps^2)) -> EUP, matches torch clamp.
    inv = lax.rsqrt(jnp.maximum(nf2, eps2)) * lax.rsqrt(jnp.maximum(nfo2, eps2))
    return 1.0 - dot * inv                                        # (1, T)


def _cos_kernel(f_ref, fo_ref, out_ref):
    out_ref[0] = _cos_loss_row(f_ref, fo_ref)


def _cos_kernel_masked(f_ref, fo_ref, m_ref, out_ref):
    out_ref[0] = _cos_loss_row(f_ref, fo_ref) * m_ref[0].astype(jnp.float32)


# ---------------------------------------------------------------------------
# Helpers
# ---------------------------------------------------------------------------
def _round_up(x, m):
    return ((x + m - 1) // m) * m


def _choose_tile_hw(hw, c, feat_itemsize, mask_itemsize, max_tile_hw,
                    vmem_budget=12 * (1 << 20)):
    """Largest 128-multiple lane tile keeping double-buffered blocks in budget."""
    # Per lane: 2 feature inputs x 2 buffers, mask x 2 buffers, f32 out x 2.
    bytes_per_lane = 2 * 2 * c * feat_itemsize + 2 * mask_itemsize + 2 * 4
    t = (vmem_budget // bytes_per_lane) // 128 * 128
    max_tile_hw = max(128, (max_tile_hw // 128) * 128)
    t = max(128, min(t, max_tile_hw, _round_up(hw, 128)))
    return t


def _compute_mask_old_classes(labels, classes_old, h, w):
    """labels (B, HL, WL) int -> bool (B, H, W): nearest-downsampled < classes_old."""
    hl, wl = labels.shape[1], labels.shape[2]
    hi = jnp.floor(jnp.arange(h) * (hl / h)).astype(jnp.int32)
    wi = jnp.floor(jnp.arange(w) * (wl / w)).astype(jnp.int32)
    labels_down = labels[:, hi][:, :, wi]                        # (B, H, W)
    return labels_down < classes_old


# ---------------------------------------------------------------------------
# Wrapper
# ---------------------------------------------------------------------------
def distillation_encoder_loss(features, features_old, labels, classes_old,
                              *, mask=False, loss_de_cosine=False,
                              max_tile_hw=4096):
    B, C, H, W = features.shape
    HW = H * W
    f = features.reshape(B, C, HW)
    fo = features_old.reshape(B, C, HW)

    tile = _choose_tile_hw(HW, C, features.dtype.itemsize, 2, max_tile_hw)
    hw_pad = _round_up(HW, tile)
    n_ht = hw_pad // tile
    pad = hw_pad - HW

    # Denominator (depends only on the mask) lives entirely in the wrapper.
    if mask:
        m_pix = _compute_mask_old_classes(labels, classes_old, H, W)  # (B,H,W) bool
        pixel_count = jnp.sum(m_pix.astype(jnp.float32))
    else:
        m_pix = None
        pixel_count = jnp.float32(B * HW)

    if pad > 0:
        f = jnp.pad(f, ((0, 0), (0, 0), (0, pad)))
        fo = jnp.pad(fo, ((0, 0), (0, 0), (0, pad)))

    inputs = [f, fo]
    in_specs = [pl.BlockSpec((1, C, tile), lambda b, h: (b, 0, h)),
                pl.BlockSpec((1, C, tile), lambda b, h: (b, 0, h))]

    # Mask input is needed when the module asks for it, or to cancel padding.
    use_mask_kernel = mask or (pad > 0)
    if use_mask_kernel:
        if mask:
            m = m_pix.reshape(B, 1, HW).astype(jnp.bfloat16)
        else:
            m = jnp.ones((B, 1, HW), dtype=jnp.bfloat16)
        if pad > 0:
            m = jnp.pad(m, ((0, 0), (0, 0), (0, pad)))   # zeros in padded lanes
        inputs.append(m)
        in_specs.append(pl.BlockSpec((1, 1, tile), lambda b, h: (b, 0, h)))
        kernel = _cos_kernel_masked if loss_de_cosine else _mse_kernel_masked
    else:
        kernel = _cos_kernel if loss_de_cosine else _mse_kernel

    partial = pl.pallas_call(
        kernel,
        out_shape=jax.ShapeDtypeStruct((B, 1, hw_pad), jnp.float32),
        grid_spec=pltpu.PrefetchScalarGridSpec(
            num_scalar_prefetch=0,
            grid=(B, n_ht),
            in_specs=in_specs,
            out_specs=pl.BlockSpec((1, 1, tile), lambda b, h: (b, 0, h)),
        ),
        compiler_params=pltpu.CompilerParams(
            dimension_semantics=("parallel", "parallel")),
    )(*inputs)

    num = jnp.sum(partial)
    den = pixel_count if loss_de_cosine else pixel_count * jnp.float32(C)
    return num / den


# ---------------------------------------------------------------------------
# Pure-JAX reference (mirrors the PyTorch forward, incl. per-norm eps clamp)
# ---------------------------------------------------------------------------
def _reference(features, features_old, labels, classes_old, mask, loss_de_cosine):
    B, C, H, W = features.shape
    if not loss_de_cosine:
        loss = (features - features_old) ** 2                    # (B,C,H,W)
        if mask:
            m = _compute_mask_old_classes(labels, classes_old, H, W)[:, None]
            sel = jnp.broadcast_to(m, loss.shape)
            return jnp.sum(jnp.where(sel, loss, 0.0)) / jnp.sum(sel)
        return jnp.mean(loss)
    dot = jnp.sum(features * features_old, axis=1)               # (B,H,W)
    nf = jnp.sqrt(jnp.sum(features ** 2, axis=1))
    nfo = jnp.sqrt(jnp.sum(features_old ** 2, axis=1))
    cos = dot / (jnp.maximum(nf, _COS_EPS) * jnp.maximum(nfo, _COS_EPS))
    loss = 1.0 - cos                                             # (B,H,W)
    if mask:
        m = _compute_mask_old_classes(labels, classes_old, H, W)
        return jnp.sum(jnp.where(m, loss, 0.0)) / jnp.sum(m)
    return jnp.mean(loss)


# ---------------------------------------------------------------------------
# Demo
# ---------------------------------------------------------------------------
if __name__ == "__main__":
    key = jax.random.PRNGKey(0)

    configs = [
        # (B, C, H, W, HL, WL, classes_old, max_tile_hw)
        (2, 4, 16, 16, 32, 32, 3, 4096),   # HW=256, single tile, no padding
        (2, 8, 20, 20, 40, 40, 5, 128),    # HW=400 -> pad to 512, 4 lane-tiles
    ]

    ok = True
    for (B, C, H, W, HL, WL, classes_old, max_tile) in configs:
        key, k1, k2, k3 = jax.random.split(key, 4)
        features = jax.random.normal(k1, (B, C, H, W), dtype=jnp.float32)
        features_old = jax.random.normal(k2, (B, C, H, W), dtype=jnp.float32)
        labels = jax.random.randint(k3, (B, HL, WL), 0, 10, dtype=jnp.int32)

        for use_mask in (False, True):
            for use_cos in (False, True):
                out = distillation_encoder_loss(
                    features, features_old, labels, classes_old,
                    mask=use_mask, loss_de_cosine=use_cos,
                    max_tile_hw=max_tile)
                out = jax.block_until_ready(out)
                ref = _reference(features, features_old, labels, classes_old,
                                 use_mask, use_cos)
                if not jnp.allclose(out, ref, rtol=1e-4, atol=1e-5):
                    ok = False
                    print(f"MISMATCH C={C} HW={H*W} mask={use_mask} "
                          f"cos={use_cos}: {out} vs {ref}")

    if ok:
        print("KERNEL_OK")
</pallas_src>

<mosaic_0001>
module attributes {stable_mosaic.version = 11 : i64} {
  func.func @_mse_kernel(%arg0: i32, %arg1: i32, %arg2: memref<1x4x256xf32, #tpu.memory_space<vmem>>, %arg3: memref<1x4x256xf32, #tpu.memory_space<vmem>>, %arg4: memref<1x1x256xf32, #tpu.memory_space<vmem>>) attributes {dimension_semantics = [#tpu.dimension_semantics<parallel>, #tpu.dimension_semantics<parallel>], iteration_bounds = array<i64: 2, 1>, scalar_prefetch = 0 : i64, scratch_operands = 0 : i64, tpu.core_type = #tpu.core_type<tc>, window_params = [{transform_indices = @transform_0, window_bounds = array<i64: 1, 4, 256>}, {transform_indices = @transform_1, window_bounds = array<i64: 1, 4, 256>}, {transform_indices = @transform_2, window_bounds = array<i64: 1, 1, 256>}]} {
    %c0 = arith.constant 0 : index
    %c0_0 = arith.constant 0 : index
    %c0_1 = arith.constant 0 : index
    %0 = vector.load %arg2[%c0, %c0_0, %c0_1] : memref<1x4x256xf32, #tpu.memory_space<vmem>>, vector<1x4x256xf32>
    %1 = vector.shape_cast %0 : vector<1x4x256xf32> to vector<4x256xf32>
    %c0_2 = arith.constant 0 : index
    %c0_3 = arith.constant 0 : index
    %c0_4 = arith.constant 0 : index
    %2 = vector.load %arg3[%c0_2, %c0_3, %c0_4] : memref<1x4x256xf32, #tpu.memory_space<vmem>>, vector<1x4x256xf32>
    %3 = vector.shape_cast %2 : vector<1x4x256xf32> to vector<4x256xf32>
    %4 = arith.subf %1, %3 : vector<4x256xf32>
    %5 = arith.mulf %4, %4 : vector<4x256xf32>
    %cst = arith.constant dense<0.000000e+00> : vector<256xf32>
    %6 = vector.multi_reduction <add>, %5, %cst [0] : vector<4x256xf32> to vector<256xf32>
    %7 = vector.shape_cast %6 : vector<256xf32> to vector<1x256xf32>
    %c0_5 = arith.constant 0 : index
    %c0_6 = arith.constant 0 : index
    %c0_7 = arith.constant 0 : index
    %8 = vector.load %arg4[%c0_5, %c0_6, %c0_7] : memref<1x1x256xf32, #tpu.memory_space<vmem>>, vector<1x1x256xf32>
    %9 = vector.shape_cast %8 : vector<1x1x256xf32> to vector<1x256xf32>
    %10 = vector.shape_cast %7 : vector<1x256xf32> to vector<1x1x256xf32>
    tpu.vector_store %arg4[%c0_5, %c0_6, %c0_7], %10 {strides = array<i32>} : memref<1x1x256xf32, #tpu.memory_space<vmem>>, vector<1x1x256xf32>,
    return
  }
  func.func @transform_0(%arg0: i32, %arg1: i32) -> (i32, i32, i32) {
    %c0_i32 = arith.constant 0 : i32
    %c0_i32_0 = arith.constant 0 : i32
    return %arg0, %c0_i32, %arg1 : i32, i32, i32
  }
  func.func @transform_1(%arg0: i32, %arg1: i32) -> (i32, i32, i32) {
    %c0_i32 = arith.constant 0 : i32
    %c0_i32_0 = arith.constant 0 : i32
    return %arg0, %c0_i32, %arg1 : i32, i32, i32
  }
  func.func @transform_2(%arg0: i32, %arg1: i32) -> (i32, i32, i32) {
    %c0_i32 = arith.constant 0 : i32
    %c0_i32_0 = arith.constant 0 : i32
    return %arg0, %c0_i32, %arg1 : i32, i32, i32
  }
}

</mosaic_0001>

<llo_original>
// kernel: tpu_custom_call.1
$region0: #{tpu_custom_call.1}
  #allocation0 [shape = 'u32[]', space=smem, size = 0x4, offset = 0x4, fixed_abs, tag = 'smem constant byte address 0x4 - core index']
  #allocation1 [shape = 'u32[144,128]{1,0:T(1,128)}', space=vmem, size = 0x12000, scoped, tag = 'internal scratch']
  %s0 = inlined_call_operand.hbm [shape: f32[2,4,256], index: 0, kind: input, shape index: {}]
  %s1 = inlined_call_operand.hbm [shape: f32[2,4,256], index: 1, kind: input, shape index: {}]
  %s2 = inlined_call_operand.hbm [shape: f32[2,1,256], index: 2, kind: output, shape index: {}]
  %s3 = sld [smem:[#allocation0]]
  $region49: #{tpu_custom_call.1} parent=0
    _
  %s5 = ssub.s32 1, %s3
  %s6 = scalar_select 0, %s5, %s3
  $region1: #{tpu_custom_call.1} parent=0
    #allocation2 [shape = 'u8[8192]{0}', space=vmem, size = 0x2000, scoped, tag = 'input window, operand 0']
    #allocation3 [shape = 's32[2]{0}', space=sflag, size = 0x8, scoped, tag = 'scoped memory for tpu_custom_call.1']
    #allocation4 [shape = 's32[2]{0}', space=sflag, size = 0x8, scoped, tag = 'scoped memory for tpu_custom_call.1']
    #allocation5 [shape = 'u8[8192]{0}', space=vmem, size = 0x2000, scoped, tag = 'input window, operand 1']
    #allocation6 [shape = 's32[2]{0}', space=sflag, size = 0x8, scoped, tag = 'scoped memory for tpu_custom_call.1']
    #allocation7 [shape = 'u8[2048]{0}', space=vmem, size = 0x800, scoped, tag = 'output window, operand 0']
    %7 = vsyncpa [#allocation3], 0
    %s8 = scalar_lea.sflag [#allocation3], 1
    %9 = vsyncpa %s8, 0
    %10 = vsyncpa [#allocation6], 0
    %s11 = scalar_lea.sflag [#allocation6], 1
    %12 = vsyncpa %s11, 0
    %13 = vsyncpa [#allocation4], 0
    %s14 = scalar_lea.sflag [#allocation4], 1
    %15 = vsyncpa %s14, 0
    loop: start=0, step=1, limit=4
    $region2: #{tpu_custom_call.1} parent=1 // loop_pre_header
      _
    $region3: #{tpu_custom_call.1} parent=1 // loop_header
      %s17 = sphi 0, %s21
      %p18 = scmp.ge.s32.totalorder %s17, 4
      %s24 = sphi 0, %s36
      %s25 = sphi 0, %s32
      %s26 = sphi 0, %s24
      %s27 = sphi 0, %s25
      %s28 = sphi 0, %s26
      %s29 = sphi 0, %s27
      %s41 = sphi 0, %s43
      %s44 = sphi 0, %s41
      %s45 = sphi 0, %s44
      %s61 = sphi 0, %s45
      %s69 = sphi 0, %s71
      %s72 = sphi 0, %s69
      %s73 = sphi 0, %s72
      %s89 = sphi 0, %s73
      %s97 = sphi 0, %s99
      %s100 = sphi 0, %s97
      %s101 = sphi 0, %s100
      %s117 = sphi 0, %s101
    $region4: #{tpu_custom_call.1} parent=1 // loop_header_branch
      %20 = sbr.rel (%p18) target = $region8
    $region5: #{tpu_custom_call.1} parent=1 // loop_body
      %s22 = ssub.s32 %s17, 1
      %s23 = ssub.s32 %s17, 2
      %s30 = sadd.s32 1, %s25
      %p31 = scmp.ge.s32.totalorder %s30, 1
      %s32 = scalar_select %p31, 0, %s30
      %s33 = sadd.s32 1, %s24
      %s34 = scalar_select %p31, %s33, %s24
      %p35 = scmp.ge.s32.totalorder %s34, 2
      %s36 = scalar_select %p35, 0, %s34
      %s37 = ssub.s32 %s24, %s36
      %s38 = ssub.s32 %s25, %s32
      %s39 = sor.u32 %s37, %s38
      %p40 = scmp.eq.s32.totalorder %s39, 0
      %s42 = sadd.s32 %s41, 1
      %s43 = scalar_select %p40, %s41, %s42
      %p46 = pneg %p40
      %p47 = scmp.eq.s32.totalorder %s17, 1
      %p48 = por %p46, %p47
      %p49 = scmp.ne.s32.totalorder %s41, %s44
      %p50 = scmp.eq.s32.totalorder %s17, 0
      %p51 = por %p49, %p50
      %p52 = scmp.ne.s32.totalorder %s41, %s44
      %p53 = scmp.eq.s32.totalorder %s22, 1
      %p54 = por %p52, %p53
      %p55 = scmp.ne.s32.totalorder %s44, %s45
      %p56 = scmp.eq.s32.totalorder %s22, 0
      %p57 = por %p55, %p56
      %p58 = scmp.ne.s32.totalorder %s44, %s45
      %p59 = scmp.eq.s32.totalorder %s23, 1
      %p60 = por %p58, %p59
      %p62 = scmp.ne.s32.totalorder %s45, %s61
      %p63 = scmp.eq.s32.totalorder %s23, 0
      %p64 = por %p62, %p63
      %s65 = ssub.s32 %s24, %s36
      %s66 = ssub.s32 %s25, %s32
      %s67 = sor.u32 %s65, %s66
      %p68 = scmp.eq.s32.totalorder %s67, 0
      %s70 = sadd.s32 %s69, 1
      %s71 = scalar_select %p68, %s69, %s70
      %p74 = pneg %p68
      %p75 = scmp.eq.s32.totalorder %s17, 1
      %p76 = por %p74, %p75
      %p77 = scmp.ne.s32.totalorder %s69, %s72
      %p78 = scmp.eq.s32.totalorder %s17, 0
      %p79 = por %p77, %p78
      %p80 = scmp.ne.s32.totalorder %s69, %s72
      %p81 = scmp.eq.s32.totalorder %s22, 1
      %p82 = por %p80, %p81
      %p83 = scmp.ne.s32.totalorder %s72, %s73
      %p84 = scmp.eq.s32.totalorder %s22, 0
      %p85 = por %p83, %p84
      %p86 = scmp.ne.s32.totalorder %s72, %s73
      %p87 = scmp.eq.s32.totalorder %s23, 1
      %p88 = por %p86, %p87
      %p90 = scmp.ne.s32.totalorder %s73, %s89
      %p91 = scmp.eq.s32.totalorder %s23, 0
      %p92 = por %p90, %p91
      %s93 = ssub.s32 %s24, %s36
      %s94 = ssub.s32 %s25, %s32
      %s95 = sor.u32 %s93, %s94
      %p96 = scmp.eq.s32.totalorder %s95, 0
      %s98 = sadd.s32 %s97, 1
      %s99 = scalar_select %p96, %s97, %s98
      %p102 = pneg %p96
      %p103 = scmp.eq.s32.totalorder %s17, 1
      %p104 = por %p102, %p103
      %p105 = scmp.ne.s32.totalorder %s97, %s100
      %p106 = scmp.eq.s32.totalorder %s17, 0
      %p107 = por %p105, %p106
      %p108 = scmp.ne.s32.totalorder %s97, %s100
      %p109 = scmp.eq.s32.totalorder %s22, 1
      %p110 = por %p108, %p109
      %p111 = scmp.ne.s32.totalorder %s100, %s101
      %p112 = scmp.eq.s32.totalorder %s22, 0
      %p113 = por %p111, %p112
      %p114 = scmp.ne.s32.totalorder %s100, %s101
      %p115 = scmp.eq.s32.totalorder %s23, 1
      %p116 = por %p114, %p115
      %p118 = scmp.ne.s32.totalorder %s101, %s117
      %p119 = scmp.eq.s32.totalorder %s23, 0
      %p120 = por %p118, %p119
      %p121 = scmp.le.s32.totalorder 1, %s17
      %p122 = scmp.lt.s32.totalorder %s17, 3
      %p123 = pnand %p121, %p122
      %p124 = pneg %p123
      // Predicated region
      $region9: #{tpu_custom_call.1} parent=5 // pred_check
        _
      $region10: #{tpu_custom_call.1} parent=5 // pred_check_branch
        %126 = sbr.rel (%p123) target = $region12
      $region11: #{tpu_custom_call.1} parent=5 // pred_region
        %s127 = ssub.s32 %s17, 1
      $region12: #{tpu_custom_call.1} parent=5 // pred_fallthru
        _
      %p128 = scmp.lt.s32.totalorder %s17, 2
      // Predicated region
      $region13: #{tpu_custom_call.1} parent=5 // pred_check
        %p129 = pneg %p128
      $region14: #{tpu_custom_call.1} parent=5 // pred_check_branch
        %131 = sbr.rel (%p129) target = $region16
      $region15: #{tpu_custom_call.1} parent=5 // pred_region
        // Predicated region
        $region17: #{tpu_custom_call.1} parent=15 // pred_check
          %p132 = pneg %p51
        $region18: #{tpu_custom_call.1} parent=15 // pred_check_branch
          %134 = sbr.rel (%p132) target = $region20
        $region19: #{tpu_custom_call.1} parent=15 // pred_region
          %s135 = sand.u32 %s41, 1
          %s136 = scalar_lea.sflag [#allocation3], %s135
          %s137 = sand.u32 %s41, 1
          %s138 = smul.addr %s137, 8
          %s139 = scalar_lea.vmem [#allocation2], %s138
          %s140 = smul.u32 2, %s25
          %s142 = ssub.s32 128, 128
          %143 = vsyncadd %s136, %s142
          %s144 = smul.addr %s24, 2
          %s145 = sadd.s32 %s140, %s144
          %s146 = smul.addr %s145, 64
          %s147 = scalar_lea.hbm %s0, %s146
          %s149 = sshll.u32 %s139, 4
          %s150 = int_to_ptr.vmem [resolvable:$true] %s149
          %152 = dma.hbm_to_vmem [thread:$0]  %s147, 128, %s150, %s136
        $region20: #{tpu_custom_call.1} parent=15 // pred_fallthru
          _
        // Predicated region
        $region21: #{tpu_custom_call.1} parent=15 // pred_check
          %p153 = pneg %p79
        $region22: #{tpu_custom_call.1} parent=15 // pred_check_branch
          %155 = sbr.rel (%p153) target = $region24
        $region23: #{tpu_custom_call.1} parent=15 // pred_region
          %s156 = sand.u32 %s69, 1
          %s157 = scalar_lea.sflag [#allocation6], %s156
          %s158 = sand.u32 %s69, 1
          %s159 = smul.addr %s158, 8
          %s160 = scalar_lea.vmem [#allocation5], %s159
          %s161 = smul.u32 2, %s25
          %s163 = ssub.s32 128, 128
          %164 = vsyncadd %s157, %s163
          %s165 = smul.addr %s24, 2
          %s166 = sadd.s32 %s161, %s165
          %s167 = smul.addr %s166, 64
          %s168 = scalar_lea.hbm %s1, %s167
          %s170 = sshll.u32 %s160, 4
          %s171 = int_to_ptr.vmem [resolvable:$true] %s170
          %173 = dma.hbm_to_vmem [thread:$0]  %s168, 128, %s171, %s157
        $region24: #{tpu_custom_call.1} parent=15 // pred_fallthru
          _
      $region16: #{tpu_custom_call.1} parent=5 // pred_fallthru
        _
      %p174 = scmp.le.s32.totalorder 1, %s17
      %p175 = scmp.lt.s32.totalorder %s17, 3
      %p176 = pnand %p174, %p175
      %p177 = pneg %p176
      // Predicated region
      $region25: #{tpu_custom_call.1} parent=5 // pred_check
        _
      $region26: #{tpu_custom_call.1} parent=5 // pred_check_branch
        %179 = sbr.rel (%p176) target = $region28
      $region27: #{tpu_custom_call.1} parent=5 // pred_region
        %s180 = ssub.s32 %s17, 1
        %s181 = sand.u32 %s44, 1
        %s182 = scalar_lea.sflag [#allocation3], %s181
        %s183 = sand.u32 %s44, 1
        %s184 = smul.addr %s183, 8
        %s185 = scalar_lea.vmem [#allocation2], %s184
        // Predicated region
        $region29: #{tpu_custom_call.1} parent=27 // pred_check
          %p186 = pneg %p57
        $region30: #{tpu_custom_call.1} parent=27 // pred_check_branch
          %188 = sbr.rel (%p186) target = $region32
        $region31: #{tpu_custom_call.1} parent=27 // pred_region
          %189 = dma.done %s182, 128
        $region32: #{tpu_custom_call.1} parent=27 // pred_fallthru
          _
        %s190 = sand.u32 %s72, 1
        %s191 = scalar_lea.sflag [#allocation6], %s190
        %s192 = sand.u32 %s72, 1
        %s193 = smul.addr %s192, 8
        %s194 = scalar_lea.vmem [#allocation5], %s193
        // Predicated region
        $region33: #{tpu_custom_call.1} parent=27 // pred_check
          %p195 = pneg %p85
        $region34: #{tpu_custom_call.1} parent=27 // pred_check_branch
          %197 = sbr.rel (%p195) target = $region36
        $region35: #{tpu_custom_call.1} parent=27 // pred_region
          %198 = dma.done %s191, 128
        $region36: #{tpu_custom_call.1} parent=27 // pred_fallthru
          _
        %s199 = sand.u32 %s44, 1
        %s200 = scalar_lea.sflag [#allocation3], %s199
        %s201 = sand.u32 %s44, 1
        %s202 = smul.addr %s201, 8
        %s203 = scalar_lea.vmem [#allocation2], %s202
        %p204 = pneg %p57
        %p205 = pneg %p54
        %s206 = sand.u32 %s72, 1
        %s207 = scalar_lea.sflag [#allocation6], %s206
        %s208 = sand.u32 %s72, 1
        %s209 = smul.addr %s208, 8
        %s210 = scalar_lea.vmem [#allocation5], %s209
        %p211 = pneg %p85
        %p212 = pneg %p82
        %p213 = pneg %p113
        %p214 = pneg %p110
        %s215 = sand.u32 %s100, 1
        %s216 = scalar_lea.sflag [#allocation4], %s215
        %s217 = sand.u32 %s100, 1
        %s218 = smul.addr %s217, 2
        %s219 = scalar_lea.vmem [#allocation7], %s218
        %s220 = smul.u32 2, %s27
        %s221 = smul.u32 2, %s27
        %s222 = smul.u32 2, %s27
        %v223 = vld [vmem:[%s185] sm:$0xff]
        %v224 = vld [vmem:[%s194] sm:$0xff]
        %v225 = vsub.f32 %v223, %v224
        %v226 = vmul.f32 %v225, %v225
        %v228 = vcombine.high %v226, %v226
        %vm230 = vcmask 1043456
        %v231 = vsel %vm230, %v226, 0.0
        %v232 = vrot.slane %v231, 4
        %v233 = vadd.f32 %v231, %v232
        %v234 = vrot.slane %v233, 2
        %v235 = vadd.f32 %v233, %v234
        %v236 = vrot.slane %v235, 1
        %v237 = vadd.f32 %v235, %v236
        %v238 = vsel %vm230, %v228, 0.0
        %v239 = vrot.slane %v238, 4
        %v240 = vadd.f32 %v238, %v239
        %v241 = vrot.slane %v240, 2
        %v242 = vadd.f32 %v240, %v241
        %v243 = vrot.slane %v242, 1
        %v244 = vadd.f32 %v242, %v243
        %v247 = vcombine.low %v237, %v244
        %v249 = vunpack.c.l.s4 1966171168
        %v250 = vunpack.c.0.s8 %v249
        %v251 = vlaneseq
        %v252 = vshrl.u32 %v251, 7
        %v253 = vsub.s32 %v250, %v252
        %v254 = vrot.slane %v247, %v253
        %v256 = vunpack.c.l.s4 1966171168
        %v257 = vunpack.c.0.s8 %v256
        %v258 = vlaneseq
        %v259 = vshrl.u32 %v258, 7
        %v260 = vsub.s32 %v257, %v259
        %v261 = vrot.slane %v254, %v260
        %v263 = vlaneseq
        %vm264 = vcmp.ge.s32.totalorder %v263, 0
        %vm265 = vcmp.lt.s32.totalorder %v263, 256
        %vm266 = vmand %vm264, %vm265
        %267 = vst.msk [vmem:[%s219] sm:$0x3] %vm266, %v261
        %s268 = sand.u32 %s100, 1
        %s269 = scalar_lea.sflag [#allocation4], %s268
        %s270 = sand.u32 %s100, 1
        %s271 = smul.addr %s270, 2
        %s272 = scalar_lea.vmem [#allocation7], %s271
        // Predicated region
        $region37: #{tpu_custom_call.1} parent=27 // pred_check
          %p273 = pneg %p110
        $region38: #{tpu_custom_call.1} parent=27 // pred_check_branch
          %275 = sbr.rel (%p273) target = $region40
        $region39: #{tpu_custom_call.1} parent=27 // pred_region
          %s276 = smul.u32 2, %s27
          %s278 = ssub.s32 32, 32
          %279 = vsyncadd %s269, %s278
          %s280 = smul.addr %s26, 2
          %s281 = sadd.s32 %s276, %s280
          %s282 = smul.addr %s281, 16
          %s283 = scalar_lea.hbm %s2, %s282
          %s285 = sshll.u32 %s272, 4
          %s286 = int_to_ptr.vmem [resolvable:$true] %s285
          %288 = dma.vmem_to_hbm [thread:$0]  %s286, 32, %s283, %s269
        $region40: #{tpu_custom_call.1} parent=27 // pred_fallthru
          _
      $region28: #{tpu_custom_call.1} parent=5 // pred_fallthru
        _
      %p289 = scmp.le.s32.totalorder 2, %s17
      // Predicated region
      $region41: #{tpu_custom_call.1} parent=5 // pred_check
        %p290 = pneg %p289
      $region42: #{tpu_custom_call.1} parent=5 // pred_check_branch
        %292 = sbr.rel (%p290) target = $region44
      $region43: #{tpu_custom_call.1} parent=5 // pred_region
        %s293 = ssub.s32 %s17, 2
        // Predicated region
        $region45: #{tpu_custom_call.1} parent=43 // pred_check
          %p294 = pneg %p116
        $region46: #{tpu_custom_call.1} parent=43 // pred_check_branch
          %296 = sbr.rel (%p294) target = $region48
        $region47: #{tpu_custom_call.1} parent=43 // pred_region
          %s297 = sand.u32 %s101, 1
          %s298 = scalar_lea.sflag [#allocation4], %s297
          %s299 = sand.u32 %s101, 1
          %s300 = smul.addr %s299, 2
          %s301 = scalar_lea.vmem [#allocation7], %s300
          %302 = dma.done %s298, 32
        $region48: #{tpu_custom_call.1} parent=43 // pred_fallthru
          _
      $region44: #{tpu_custom_call.1} parent=5 // pred_fallthru
        _
    $region6: #{tpu_custom_call.1} parent=1 // loop_footer
      %s21 = sadd.s32 1, %s17
    $region7: #{tpu_custom_call.1} parent=1 // loop_footer_branch
      %16 = sbr.rel target = $region3
    $region8: #{tpu_custom_call.1} parent=1 // loop_exit
      _
    %303 = vsyncpa [#allocation3], 1
    %s304 = scalar_lea.sflag [#allocation3], 1
    %305 = vsyncpa %s304, 1
    %306 = vsyncpa [#allocation6], 1
    %s307 = scalar_lea.sflag [#allocation6], 1
    %308 = vsyncpa %s307, 1
    %309 = vsyncpa [#allocation4], 1
    %s310 = scalar_lea.sflag [#allocation4], 1
    %311 = vsyncpa %s310, 1

</llo_original>
